<compile_context>
chip_gen: v7x
topology: tpu7x:2x2x1
jax: 0.10.0
libtpu: 0.0.40
codegen_flags: <defaults>
</compile_context>

<pallas_src>
import jax
import jax.numpy as jnp
from jax.experimental import pallas as pl
from jax.experimental.pallas import tpu as pltpu


def attention_fusion_kernel(
    x_ref,        # (B*T, Din+1)    x flattened on host, trailing ones column
    wqkv_ref,     # (Din+1, 3*Dout) = [[Wq | Wk | Wv], [bq | 0 | 0]]
    wo_ref,       # (Dout, Din)
    bo_ref,       # (1, Din)        = bv @ Wo + bo
    out_ref,      # (B, Din)
):
    Dout, Din = wo_ref.shape
    B = out_ref.shape[0]
    T = x_ref.shape[0] // B

    # One fused QKV(+bq) matmul over the flattened batch.  bk is dropped
    # (softmax-invariant), bv is folded into bo on the host.
    qkv = jnp.dot(x_ref[...], wqkv_ref[...],
                  preferred_element_type=jnp.float32)        # (B*T, 3*Dout)

    q = qkv[:, :Dout].reshape(B, T, Dout)
    k = qkv[:, Dout:2 * Dout].reshape(B, T, Dout)
    v = qkv[:, 2 * Dout:].reshape(B, T, Dout)

    # attention_scores = bmm(Q, K^T) -> (B, T, T).  No 1/sqrt(d_k) scaling:
    # the PyTorch module applies none.
    scores = jnp.einsum("bte,bse->bts", q, k,
                        preferred_element_type=jnp.float32)

    # Numerically-stable softmax with the mean-over-queries 1/T folded into
    # the normalization.  Exact divide: the kernel is overhead-bound, so the
    # approx EUP reciprocal saves nothing and would cost accuracy.
    m = jnp.max(scores, axis=-1, keepdims=True)
    e = jnp.exp(scores - m)
    denom = jnp.sum(e, axis=-1, keepdims=True)
    w = e / (denom * jnp.float32(T))                          # rows sum to 1/T

    # Mean over queries commuted ahead of attn@V:
    #   pooled_attn = sum_t attn[b,t,:]/T  -> (B,1,T)
    #   pooled      = pooled_attn @ V      -> (B,1,Dout)  (T=8x smaller matmul)
    pooled_attn = jnp.sum(w, axis=1, keepdims=True)           # (B, 1, T)
    pooled = jnp.einsum("bts,bsd->btd", pooled_attn, v,
                        preferred_element_type=jnp.float32)[:, 0, :]  # (B, Dout)

    # Output projection; bv already folded into bo_ref on the host.
    out_ref[...] = (
        jnp.dot(pooled, wo_ref[...], preferred_element_type=jnp.float32)
        + bo_ref[...]
    ).astype(out_ref.dtype)


def attention_fusion_forward(x, params):
    """x: (B, T, Din) float32; params: PyTorch-Linear-like weights stored
    transposed, i.e. (in_dim, out_dim)."""
    B, T, Din = x.shape
    Dout = params["wq"].shape[1]

    # ---- Host-side fusion (done once, outside the kernel) ----
    # Flatten batch into matmul rows and append a ones column so bq rides
    # inside the single QKV matmul.
    x_flat = jnp.concatenate(
        [x.reshape(B * T, Din), jnp.ones((B * T, 1), x.dtype)], axis=1)          # (B*T, Din+1)
    # Wqkv = [Wq | Wk | Wv] with an extra [bq | 0 | 0] row for the ones column.
    # bk is omitted: softmax over keys is invariant to the per-query constant q·bk.
    wqkv = jnp.concatenate([params["wq"], params["wk"], params["wv"]], axis=1)   # (Din, 3*Dout)
    bias_row = jnp.concatenate(
        [params["bq"], jnp.zeros((2 * Dout,), wqkv.dtype)])[None, :]             # (1, 3*Dout)
    wqkv_aug = jnp.concatenate([wqkv, bias_row], axis=0)                         # (Din+1, 3*Dout)
    # softmax rows sum to 1 and mean/projection are linear => fold bv straight
    # into the output bias.
    bo_fused = (params["bv"] @ params["wo"] + params["bo"])[None, :]             # (1, Din)

    full = lambda shape: pl.BlockSpec(shape, lambda: tuple(0 for _ in shape))

    return pl.pallas_call(
        attention_fusion_kernel,
        out_shape=jax.ShapeDtypeStruct((B, Din), jnp.float32),
        grid_spec=pl.GridSpec(
            grid=(),
            in_specs=[
                full((B * T, Din + 1)),
                full((Din + 1, 3 * Dout)),
                full((Dout, Din)),
                full((1, Din)),
            ],
            out_specs=full((B, Din)),
        ),
        compiler_params=pltpu.CompilerParams(),
    )(x_flat, wqkv_aug, params["wo"], bo_fused)


def init_params(key, input_dim, output_dim):
    """Deterministic synthetic parameters (PyTorch Linear-like init, stored
    transposed so the math is x @ W + b)."""
    ks = jax.random.split(key, 8)
    scale_in = 1.0 / jnp.sqrt(input_dim)
    scale_out = 1.0 / jnp.sqrt(output_dim)
    return {
        "wq": jax.random.uniform(ks[0], (input_dim, output_dim), jnp.float32, -scale_in, scale_in),
        "bq": jax.random.uniform(ks[1], (output_dim,), jnp.float32, -scale_in, scale_in),
        "wk": jax.random.uniform(ks[2], (input_dim, output_dim), jnp.float32, -scale_in, scale_in),
        "bk": jax.random.uniform(ks[3], (output_dim,), jnp.float32, -scale_in, scale_in),
        "wv": jax.random.uniform(ks[4], (input_dim, output_dim), jnp.float32, -scale_in, scale_in),
        "bv": jax.random.uniform(ks[5], (output_dim,), jnp.float32, -scale_in, scale_in),
        "wo": jax.random.uniform(ks[6], (output_dim, input_dim), jnp.float32, -scale_out, scale_out),
        "bo": jax.random.uniform(ks[7], (input_dim,), jnp.float32, -scale_out, scale_out),
    }


def reference_forward(x, p):
    """Pure-JAX reference matching the PyTorch module semantics exactly
    (all biases applied, softmax, attn@V, output projection, mean over T)."""
    q = x @ p["wq"] + p["bq"]
    k = x @ p["wk"] + p["bk"]
    v = x @ p["wv"] + p["bv"]
    scores = jnp.einsum("bte,bse->bts", q, k)
    attn = jax.nn.softmax(scores, axis=-1)
    wv = jnp.einsum("bts,bse->bte", attn, v)
    out = wv @ p["wo"] + p["bo"]
    return out.mean(axis=1)


if __name__ == "__main__":
    # Shapes consistent with the module's forward:
    # x: (batch=2, seq(num_templates)=8, input_dim=32), output_dim=16.
    B, T, Din, Dout = 2, 8, 32, 16

    key = jax.random.PRNGKey(0)
    kx, kp = jax.random.split(key)
    x = jax.random.normal(kx, (B, T, Din), dtype=jnp.float32)
    params = init_params(kp, Din, Dout)

    fused = attention_fusion_forward(x, params)
    fused = jax.block_until_ready(fused)

    ref = reference_forward(x, params)
    assert fused.shape == (B, Din)
    # Softmax now uses an exact divide (no approx reciprocal); the remaining
    # tolerance covers XLA's default (bf16-pass) f32 matmul precision in the
    # pure-JAX reference vs the kernel's MXU f32 accumulation.
    assert jnp.allclose(fused, ref, atol=2e-3, rtol=2e-3), "mismatch vs reference"

    print("KERNEL_OK")
</pallas_src>

<mosaic_0001>
module attributes {stable_mosaic.version = 11 : i64} {
  func.func @attention_fusion_kernel(%arg0: memref<16x33xf32, #tpu.memory_space<vmem>>, %arg1: memref<33x48xf32, #tpu.memory_space<vmem>>, %arg2: memref<16x32xf32, #tpu.memory_space<vmem>>, %arg3: memref<1x32xf32, #tpu.memory_space<vmem>>, %arg4: memref<2x32xf32, #tpu.memory_space<vmem>>) attributes {dimension_semantics = [], scalar_prefetch = 0 : i64, scratch_operands = 0 : i64, tpu.core_type = #tpu.core_type<tc>} {
    %c0 = arith.constant 0 : index
    %c0_0 = arith.constant 0 : index
    %0 = vector.load %arg0[%c0, %c0_0] : memref<16x33xf32, #tpu.memory_space<vmem>>, vector<16x33xf32>
    %c0_1 = arith.constant 0 : index
    %c0_2 = arith.constant 0 : index
    %1 = vector.load %arg1[%c0_1, %c0_2] : memref<33x48xf32, #tpu.memory_space<vmem>>, vector<33x48xf32>
    %cst = arith.constant dense<0.000000e+00> : vector<16x48xf32>
    %2 = tpu.matmul %0, %1, %cst {dimension_numbers = #tpu.dot_dimension_numbers<[1], [0], [0], [1], [0, 0, 1, 1], [], []>} : vector<16x33xf32>, vector<33x48xf32>, vector<16x48xf32> -> vector<16x48xf32>
    %3 = vector.extract_strided_slice %2 {offsets = [0, 0], sizes = [16, 16], strides = [1, 1]} : vector<16x48xf32> to vector<16x16xf32>
    %4 = vector.shape_cast %3 : vector<16x16xf32> to vector<2x8x16xf32>
    %5 = vector.extract_strided_slice %2 {offsets = [0, 16], sizes = [16, 16], strides = [1, 1]} : vector<16x48xf32> to vector<16x16xf32>
    %6 = vector.shape_cast %5 : vector<16x16xf32> to vector<2x8x16xf32>
    %7 = vector.extract_strided_slice %2 {offsets = [0, 32], sizes = [16, 16], strides = [1, 1]} : vector<16x48xf32> to vector<16x16xf32>
    %8 = vector.shape_cast %7 : vector<16x16xf32> to vector<2x8x16xf32>
    "tpu.trace_start"() <{level = 10 : i32, message = "bte,bse->bts"}> : () -> ()
    %cst_3 = arith.constant dense<0.000000e+00> : vector<2x8x8xf32>
    %9 = tpu.matmul %4, %6, %cst_3 {dimension_numbers = #tpu.dot_dimension_numbers<[2], [2], [1], [1], [0, 0, 0, 1, 1, 1], [0], [0]>} : vector<2x8x16xf32>, vector<2x8x16xf32>, vector<2x8x8xf32> -> vector<2x8x8xf32>
    "tpu.trace_stop"() : () -> ()
    %cst_4 = arith.constant dense<0xFF800000> : vector<2x8xf32>
    %10 = vector.multi_reduction <maximumf>, %9, %cst_4 [2] : vector<2x8x8xf32> to vector<2x8xf32>
    %11 = vector.shape_cast %10 : vector<2x8xf32> to vector<2x8x1xf32>
    %12 = vector.broadcast %11 : vector<2x8x1xf32> to vector<2x8x8xf32>
    %13 = arith.subf %9, %12 : vector<2x8x8xf32>
    %14 = math.exp %13 : vector<2x8x8xf32>
    %cst_5 = arith.constant dense<0.000000e+00> : vector<2x8xf32>
    %15 = vector.multi_reduction <add>, %14, %cst_5 [2] : vector<2x8x8xf32> to vector<2x8xf32>
    %16 = vector.shape_cast %15 : vector<2x8xf32> to vector<2x8x1xf32>
    %cst_6 = arith.constant 8.000000e+00 : f32
    %17 = vector.broadcast %cst_6 : f32 to vector<2x8x1xf32>
    %18 = arith.mulf %16, %17 : vector<2x8x1xf32>
    %19 = vector.broadcast %18 : vector<2x8x1xf32> to vector<2x8x8xf32>
    %20 = arith.divf %14, %19 : vector<2x8x8xf32>
    %cst_7 = arith.constant dense<0.000000e+00> : vector<2x8xf32>
    %21 = vector.multi_reduction <add>, %20, %cst_7 [1] : vector<2x8x8xf32> to vector<2x8xf32>
    %22 = vector.shape_cast %21 : vector<2x8xf32> to vector<2x1x8xf32>
    "tpu.trace_start"() <{level = 10 : i32, message = "bts,bsd->btd"}> : () -> ()
    %cst_8 = arith.constant dense<0.000000e+00> : vector<2x1x16xf32>
    %23 = tpu.matmul %22, %8, %cst_8 {dimension_numbers = #tpu.dot_dimension_numbers<[2], [1], [1], [2], [0, 0, 0, 1, 1, 2], [0], [0]>} : vector<2x1x8xf32>, vector<2x8x16xf32>, vector<2x1x16xf32> -> vector<2x1x16xf32>
    "tpu.trace_stop"() : () -> ()
    %24 = vector.shape_cast %23 : vector<2x1x16xf32> to vector<2x16xf32>
    %c0_9 = arith.constant 0 : index
    %c0_10 = arith.constant 0 : index
    %25 = vector.load %arg2[%c0_9, %c0_10] : memref<16x32xf32, #tpu.memory_space<vmem>>, vector<16x32xf32>
    %cst_11 = arith.constant dense<0.000000e+00> : vector<2x32xf32>
    %26 = tpu.matmul %24, %25, %cst_11 {dimension_numbers = #tpu.dot_dimension_numbers<[1], [0], [0], [1], [0, 0, 1, 1], [], []>} : vector<2x16xf32>, vector<16x32xf32>, vector<2x32xf32> -> vector<2x32xf32>
    %c0_12 = arith.constant 0 : index
    %c0_13 = arith.constant 0 : index
    %27 = vector.load %arg3[%c0_12, %c0_13] : memref<1x32xf32, #tpu.memory_space<vmem>>, vector<1x32xf32>
    %28 = vector.broadcast %27 : vector<1x32xf32> to vector<2x32xf32>
    %29 = arith.addf %26, %28 : vector<2x32xf32>
    %c0_14 = arith.constant 0 : index
    %c0_15 = arith.constant 0 : index
    %30 = vector.load %arg4[%c0_14, %c0_15] : memref<2x32xf32, #tpu.memory_space<vmem>>, vector<2x32xf32>
    tpu.vector_store %arg4[%c0_14, %c0_15], %29 {strides = array<i32>} : memref<2x32xf32, #tpu.memory_space<vmem>>, vector<2x32xf32>,
    return
  }
}

</mosaic_0001>

<llo_original>
// kernel: tpu_custom_call.1
$region0: #{tpu_custom_call.1}
  #allocation0 [shape = 'u32[]', space=smem, size = 0x4, offset = 0x4, fixed_abs, tag = 'smem constant byte address 0x4 - core index']
  #allocation1 [shape = 'u32[144,128]{1,0:T(1,128)}', space=vmem, size = 0x12000, scoped, tag = 'internal scratch']
  %s0 = inlined_call_operand.hbm [shape: f32[16,33], index: 0, kind: input, shape index: {}]
  %s1 = inlined_call_operand.hbm [shape: f32[33,48], index: 1, kind: input, shape index: {}]
  %s2 = inlined_call_operand.hbm [shape: f32[16,32], index: 2, kind: input, shape index: {}]
  %s3 = inlined_call_operand.vmem [shape: f32[1,32], index: 3, kind: input, shape index: {}]
  %s4 = inlined_call_operand.hbm [shape: f32[2,32], index: 4, kind: output, shape index: {}]
  %s5 = sld [smem:[#allocation0]]
  $region38: #{tpu_custom_call.1} parent=0
    _
  %s7 = ssub.s32 1, %s5
  %s8 = scalar_select 0, %s7, %s5
  $region1: #{tpu_custom_call.1} parent=0
    #allocation2 [shape = 'u8[8192]{0}', space=vmem, size = 0x2000, scoped, tag = 'input window, operand 0, single buffered']
    #allocation3 [shape = 's32[1]{0}', space=sflag, size = 0x4, scoped, tag = 'scoped memory for tpu_custom_call.1']
    #allocation4 [shape = 's32[1]{0}', space=sflag, size = 0x4, scoped, tag = 'scoped memory for tpu_custom_call.1']
    #allocation5 [shape = 'u8[20480]{0}', space=vmem, size = 0x5000, scoped, tag = 'input window, operand 1, single buffered']
    #allocation6 [shape = 's32[1]{0}', space=sflag, size = 0x4, scoped, tag = 'scoped memory for tpu_custom_call.1']
    #allocation7 [shape = 'u8[8192]{0}', space=vmem, size = 0x2000, scoped, tag = 'input window, operand 2, single buffered']
    #allocation8 [shape = 'u8[1024]{0}', space=vmem, size = 0x400, scoped, tag = 'output window, operand 0, single buffered']
    %9 = vsyncpa [#allocation3], 0
    %10 = vsyncpa [#allocation6], 0
    %11 = vsyncpa [#allocation4], 0
    // Predicated region
    $region2: #{tpu_custom_call.1} parent=1 // pred_check
      _
    $region3: #{tpu_custom_call.1} parent=1 // pred_check_branch
      %13 = sbr.rel (0) target = $region5
    $region4: #{tpu_custom_call.1} parent=1 // pred_region
      %s15 = ssub.s32 256, 256
      %16 = vsyncadd [#allocation3], %s15
      %s17 = sshll.u32 [#allocation2], 4
      %s18 = int_to_ptr.vmem [resolvable:$true] %s17
      %23 = dma.hbm_to_vmem [thread:$0]  %s0, 256, %s18, [#allocation3], 128, 128, 8
    $region5: #{tpu_custom_call.1} parent=1 // pred_fallthru
      _
    // Predicated region
    $region6: #{tpu_custom_call.1} parent=1 // pred_check
      _
    $region7: #{tpu_custom_call.1} parent=1 // pred_check_branch
      %25 = sbr.rel (0) target = $region9
    $region8: #{tpu_custom_call.1} parent=1 // pred_region
      %s27 = ssub.s32 640, 640
      %28 = vsyncadd [#allocation6], %s27
      %s29 = sshll.u32 [#allocation5], 4
      %s30 = int_to_ptr.vmem [resolvable:$true] %s29
      %35 = dma.hbm_to_vmem [thread:$0]  %s1, 640, %s30, [#allocation6], 128, 128, 8
    $region9: #{tpu_custom_call.1} parent=1 // pred_fallthru
      _
    // Predicated region
    $region10: #{tpu_custom_call.1} parent=1 // pred_check
      _
    $region11: #{tpu_custom_call.1} parent=1 // pred_check_branch
      %37 = sbr.rel (0) target = $region13
    $region12: #{tpu_custom_call.1} parent=1 // pred_region
      %s39 = ssub.s32 256, 256
      %40 = vsyncadd [#allocation6], %s39
      %s41 = sshll.u32 [#allocation7], 4
      %s42 = int_to_ptr.vmem [resolvable:$true] %s41
      %47 = dma.hbm_to_vmem [thread:$0]  %s2, 256, %s42, [#allocation6], 128, 128, 8
    $region13: #{tpu_custom_call.1} parent=1 // pred_fallthru
      _
    // Predicated region
    $region14: #{tpu_custom_call.1} parent=1 // pred_check
      _
    $region15: #{tpu_custom_call.1} parent=1 // pred_check_branch
      %49 = sbr.rel (0) target = $region17
    $region16: #{tpu_custom_call.1} parent=1 // pred_region
      _
    $region17: #{tpu_custom_call.1} parent=1 // pred_fallthru
      _
    // Predicated region
    $region18: #{tpu_custom_call.1} parent=1 // pred_check
      _
    $region19: #{tpu_custom_call.1} parent=1 // pred_check_branch
      %51 = sbr.rel (0) target = $region21
    $region20: #{tpu_custom_call.1} parent=1 // pred_region
      %52 = dma.done [#allocation3], 256
    $region21: #{tpu_custom_call.1} parent=1 // pred_fallthru
      _
    // Predicated region
    $region22: #{tpu_custom_call.1} parent=1 // pred_check
      _
    $region23: #{tpu_custom_call.1} parent=1 // pred_check_branch
      %54 = sbr.rel (0) target = $region25
    $region24: #{tpu_custom_call.1} parent=1 // pred_region
      %55 = dma.done [#allocation6], 640
    $region25: #{tpu_custom_call.1} parent=1 // pred_fallthru
      _
    // Predicated region
    $region26: #{tpu_custom_call.1} parent=1 // pred_check
      _
    $region27: #{tpu_custom_call.1} parent=1 // pred_check_branch
      %57 = sbr.rel (0) target = $region29
    $region28: #{tpu_custom_call.1} parent=1 // pred_region
      %58 = dma.done [#allocation6], 256
    $region29: #{tpu_custom_call.1} parent=1 // pred_fallthru
      _
    %v59 = vld [vmem:[#allocation2] sm:$0xff]
    %v60 = vld [vmem:[#allocation2 + $0x8] sm:$0xff]
    %v61 = vld [vmem:[#allocation5] sm:$0xff]
    %v62 = vld [vmem:[#allocation5 + $0x8] sm:$0xff]
    %v63 = vld [vmem:[#allocation5 + $0x10] sm:$0xff]
    %v64 = vld [vmem:[#allocation5 + $0x18] sm:$0xff]
    %v65 = vld [vmem:[#allocation5 + $0x20] sm:$0x1]
    %vm66 = vcmask 269312
    %v68 = vsel %vm66, %v59, 0
    %v71 = vsel %vm66, %v60, 0
    %vm73 = vcmask 1040384
    %v75 = vsel %vm73, %v65, 0
    %77 = vmatprep.subr.mxu0 0.0
    %78 = vmatpush1.msra.mxu0 %v61
    %79 = vmatprep.subr.mxu0 0.0
    %80 = vmatpush1.msra.mxu0 %v62
    %81 = vmatprep.subr.mxu0 0.0
    %82 = vmatpush1.msra.mxu0 %v63
    %83 = vmatprep.subr.mxu0 0.0
    %84 = vmatpush1.msra.mxu0 %v64
    %85 = vmatprep.subr.mxu0 0.0
    %86 = vmatpush1.msra.mxu0 %v75
    %87 = vmatprep.subr.mxu0 0.0
    %88 = vmatpush1.msra.mxu0 0.0
    %89 = vmatprep.subr.mxu0 0.0
    %90 = vmatpush1.msra.mxu0 0.0
    %91 = vmatprep.subr.mxu0 0.0
    %92 = vmatpush1.msra.mxu0 0.0
    %93 = vmatprep.subr.mxu0 0.0
    %94 = vmatpush1.msra.mxu0 0.0
    %95 = vmatprep.subr.mxu0 0.0
    %96 = vmatpush1.msra.mxu0 0.0
    %97 = vmatprep.subr.mxu0 0.0
    %98 = vmatpush1.msra.mxu0 0.0
    %99 = vmatprep.subr.mxu0 0.0
    %100 = vmatpush1.msra.mxu0 0.0
    %101 = vmatprep.subr.mxu0 0.0
    %102 = vmatpush1.msra.mxu0 0.0
    %103 = vmatprep.subr.mxu0 0.0
    %104 = vmatpush1.msra.mxu0 0.0
    %105 = vmatprep.subr.mxu0 0.0
    %106 = vmatpush1.msra.mxu0 0.0
    %107 = vmatprep.subr.mxu0 0.0
    %108 = vmatpush1.msra.mxu0 0.0
    %109 = vmatprep.subr.mxu0 0.0
    %110 = vmatpush1.msra.mxu0 0.0
    %111 = vmatprep.subr.mxu0 0.0
    %112 = vmatpush1.msra.mxu0 0.0
    %113 = vmatprep.subr.mxu0 0.0
    %114 = vmatpush1.msra.mxu0 0.0
    %115 = vmatprep.subr.mxu0 0.0
    %116 = vmatpush1.msra.mxu0 0.0
    %117 = vmatprep.subr.mxu0 0.0
    %118 = vmatpush1.msra.mxu0 0.0
    %119 = vmatprep.subr.mxu0 0.0
    %120 = vmatpush1.msra.mxu0 0.0
    %121 = vmatprep.subr.mxu0 0.0
    %122 = vmatpush1.msra.mxu0 0.0
    %123 = vmatprep.subr.mxu0 0.0
    %124 = vmatpush1.msra.mxu0 0.0
    %125 = vmatprep.subr.mxu0 0.0
    %126 = vmatpush1.msra.mxu0 0.0
    %127 = vmatprep.subr.mxu0 0.0
    %128 = vmatpush1.msra.mxu0 0.0
    %129 = vmatprep.subr.mxu0 0.0
    %130 = vmatpush1.msra.mxu0 0.0
    %131 = vmatprep.subr.mxu0 0.0
    %132 = vmatpush1.msra.mxu0 0.0
    %133 = vmatprep.subr.mxu0 0.0
    %134 = vmatpush1.msra.mxu0 0.0
    %135 = vmatprep.subr.mxu0 0.0
    %136 = vmatpush1.msra.mxu0 0.0
    %137 = vmatprep.subr.mxu0 0.0
    %138 = vmatpush1.msra.mxu0 0.0
    %139 = vmatprep.subr.mxu0 0.0
    %140 = vmatpush1.msra.mxu0 0.0
    %141 = vmatprep.mubr.f32.mxu0 0.0
    %142 = vmatmul.mubr.f32.gmra.mrb[0].mxu0 %v68
    %v143 = vpop.f32.mrb[0].mxu0
    %v144 = vadd.f32 0.0, %v143
    %v145 = vpop.f32.mrb[0].mxu0
    %146 = vmatprep.mubr.f32.mxu0 0.0
    %147 = vmatmul.mubr.f32.gmra.mrb[0].mxu0 %v71
    %v148 = vpop.f32.mrb[0].mxu0
    %v149 = vadd.f32 0.0, %v148
    %v150 = vpop.f32.mrb[0].mxu0
    %151 = vdwg.mxu0
    %153 = vrot.lane.b32.xlu0 %v144, 112
    %v154 = vpop.permute.xlu0 %153
    %vm155 = vcmask 130048
    %v156 = vsel %vm155, %v144, 0
    %v158 = vsel %vm155, %v154, 0
    %160 = vmatprep.subr.mxu0 0.0
    %161 = vmatpush1.xpose.msra.mxu0 %v158
    %162 = vmatprep.subr.mxu0 0.0
    %163 = vmatpush1.xpose.msra.mxu0 0.0
    %164 = vmatprep.subr.mxu0 0.0
    %165 = vmatpush1.xpose.msra.mxu0 0.0
    %166 = vmatprep.subr.mxu0 0.0
    %167 = vmatpush1.xpose.msra.mxu0 0.0
    %168 = vmatprep.subr.mxu0 0.0
    %169 = vmatpush1.xpose.msra.mxu0 0.0
    %170 = vmatprep.subr.mxu0 0.0
    %171 = vmatpush1.xpose.msra.mxu0 0.0
    %172 = vmatprep.subr.mxu0 0.0
    %173 = vmatpush1.xpose.msra.mxu0 0.0
    %174 = vmatprep.subr.mxu0 0.0
    %175 = vmatpush1.xpose.msra.mxu0 0.0
    %176 = vmatprep.subr.mxu0 0.0
    %177 = vmatpush1.xpose.msra.mxu0 0.0
    %178 = vmatprep.subr.mxu0 0.0
    %179 = vmatpush1.xpose.msra.mxu0 0.0
    %180 = vmatprep.subr.mxu0 0.0
    %181 = vmatpush1.xpose.msra.mxu0 0.0
    %182 = vmatprep.subr.mxu0 0.0
    %183 = vmatpush1.xpose.msra.mxu0 0.0
    %184 = vmatprep.subr.mxu0 0.0
    %185 = vmatpush1.xpose.msra.mxu0 0.0
    %186 = vmatprep.subr.mxu0 0.0
    %187 = vmatpush1.xpose.msra.mxu0 0.0
    %188 = vmatprep.subr.mxu0 0.0
    %189 = vmatpush1.xpose.msra.mxu0 0.0
    %190 = vmatprep.subr.mxu0 0.0
    %191 = vmatpush1.xpose.msra.mxu0 0.0
    %192 = vmatprep.subr.mxu0 0.0
    %193 = vmatpush1.xpose.msra.mxu0 0.0
    %194 = vmatprep.subr.mxu0 0.0
    %195 = vmatpush1.xpose.msra.mxu0 0.0
    %196 = vmatprep.subr.mxu0 0.0
    %197 = vmatpush1.xpose.msra.mxu0 0.0
    %198 = vmatprep.subr.mxu0 0.0
    %199 = vmatpush1.xpose.msra.mxu0 0.0
    %200 = vmatprep.subr.mxu0 0.0
    %201 = vmatpush1.xpose.msra.mxu0 0.0
    %202 = vmatprep.subr.mxu0 0.0
    %203 = vmatpush1.xpose.msra.mxu0 0.0
    %204 = vmatprep.subr.mxu0 0.0
    %205 = vmatpush1.xpose.msra.mxu0 0.0
    %206 = vmatprep.subr.mxu0 0.0
    %207 = vmatpush1.xpose.msra.mxu0 0.0
    %208 = vmatprep.subr.mxu0 0.0
    %209 = vmatpush1.xpose.msra.mxu0 0.0
    %210 = vmatprep.subr.mxu0 0.0
    %211 = vmatpush1.xpose.msra.mxu0 0.0
    %212 = vmatprep.subr.mxu0 0.0
    %213 = vmatpush1.xpose.msra.mxu0 0.0
    %214 = vmatprep.subr.mxu0 0.0
    %215 = vmatpush1.xpose.msra.mxu0 0.0
    %216 = vmatprep.subr.mxu0 0.0
    %217 = vmatpush1.xpose.msra.mxu0 0.0
    %218 = vmatprep.subr.mxu0 0.0
    %219 = vmatpush1.xpose.msra.mxu0 0.0
    %220 = vmatprep.subr.mxu0 0.0
    %221 = vmatpush1.xpose.msra.mxu0 0.0
    %222 = vmatprep.subr.mxu0 0.0
    %223 = vmatpush1.xpose.msra.mxu0 0.0
    %224 = vmatprep.mubr.f32.mxu0 0.0
    %225 = vmatmul.mubr.f32.gmra.mrb[0].mxu0 %v156
    %v226 = vpop.f32.mrb[0].mxu0
    %v227 = vadd.f32 0.0, %v226
    %v228 = vpop.f32.mrb[0].mxu0
    %229 = vdwg.mxu0
    %231 = vrot.lane.b32.xlu0 %v149, 112
    %v232 = vpop.permute.xlu0 %231
    %v233 = vsel %vm155, %v149, 0
    %v235 = vsel %vm155, %v232, 0
    %237 = vmatprep.subr.mxu0 0.0
    %238 = vmatpush1.xpose.msra.mxu0 %v235
    %239 = vmatprep.subr.mxu0 0.0
    %240 = vmatpush1.xpose.msra.mxu0 0.0
    %241 = vmatprep.subr.mxu0 0.0
    %242 = vmatpush1.xpose.msra.mxu0 0.0
    %243 = vmatprep.subr.mxu0 0.0
    %244 = vmatpush1.xpose.msra.mxu0 0.0
    %245 = vmatprep.subr.mxu0 0.0
    %246 = vmatpush1.xpose.msra.mxu0 0.0
    %247 = vmatprep.subr.mxu0 0.0
    %248 = vmatpush1.xpose.msra.mxu0 0.0
    %249 = vmatprep.subr.mxu0 0.0
    %250 = vmatpush1.xpose.msra.mxu0 0.0
    %251 = vmatprep.subr.mxu0 0.0
    %252 = vmatpush1.xpose.msra.mxu0 0.0
    %253 = vmatprep.subr.mxu0 0.0
    %254 = vmatpush1.xpose.msra.mxu0 0.0
    %255 = vmatprep.subr.mxu0 0.0
    %256 = vmatpush1.xpose.msra.mxu0 0.0
    %257 = vmatprep.subr.mxu0 0.0
    %258 = vmatpush1.xpose.msra.mxu0 0.0
    %259 = vmatprep.subr.mxu0 0.0
    %260 = vmatpush1.xpose.msra.mxu0 0.0
    %261 = vmatprep.subr.mxu0 0.0
    %262 = vmatpush1.xpose.msra.mxu0 0.0
    %263 = vmatprep.subr.mxu0 0.0
    %264 = vmatpush1.xpose.msra.mxu0 0.0
    %265 = vmatprep.subr.mxu0 0.0
    %266 = vmatpush1.xpose.msra.mxu0 0.0
    %267 = vmatprep.subr.mxu0 0.0
    %268 = vmatpush1.xpose.msra.mxu0 0.0
    %269 = vmatprep.subr.mxu0 0.0
    %270 = vmatpush1.xpose.msra.mxu0 0.0
    %271 = vmatprep.subr.mxu0 0.0
    %272 = vmatpush1.xpose.msra.mxu0 0.0
    %273 = vmatprep.subr.mxu0 0.0
    %274 = vmatpush1.xpose.msra.mxu0 0.0
    %275 = vmatprep.subr.mxu0 0.0
    %276 = vmatpush1.xpose.msra.mxu0 0.0
    %277 = vmatprep.subr.mxu0 0.0
    %278 = vmatpush1.xpose.msra.mxu0 0.0
    %279 = vmatprep.subr.mxu0 0.0
    %280 = vmatpush1.xpose.msra.mxu0 0.0
    %281 = vmatprep.subr.mxu0 0.0
    %282 = vmatpush1.xpose.msra.mxu0 0.0
    %283 = vmatprep.subr.mxu0 0.0
    %284 = vmatpush1.xpose.msra.mxu0 0.0
    %285 = vmatprep.subr.mxu0 0.0
    %286 = vmatpush1.xpose.msra.mxu0 0.0
    %287 = vmatprep.subr.mxu0 0.0
    %288 = vmatpush1.xpose.msra.mxu0 0.0
    %289 = vmatprep.subr.mxu0 0.0
    %290 = vmatpush1.xpose.msra.mxu0 0.0
    %291 = vmatprep.subr.mxu0 0.0
    %292 = vmatpush1.xpose.msra.mxu0 0.0
    %293 = vmatprep.subr.mxu0 0.0
    %294 = vmatpush1.xpose.msra.mxu0 0.0
    %295 = vmatprep.subr.mxu0 0.0
    %296 = vmatpush1.xpose.msra.mxu0 0.0
    %297 = vmatprep.subr.mxu0 0.0
    %298 = vmatpush1.xpose.msra.mxu0 0.0
    %299 = vmatprep.subr.mxu0 0.0
    %300 = vmatpush1.xpose.msra.mxu0 0.0
    %301 = vmatprep.mubr.f32.mxu0 0.0
    %302 = vmatmul.mubr.f32.gmra.mrb[0].mxu0 %v233
    %v303 = vpop.f32.mrb[0].mxu0
    %v304 = vadd.f32 0.0, %v303
    %v305 = vpop.f32.mrb[0].mxu0
    %306 = vdwg.mxu0
    %vm307 = vcmask 64512
    %v308 = vsel %vm307, %v227, -inf
    %309 = vmax.xlane.f32.xlu0 %v308
    %v310 = vpop.xlane.xlu0 %309
    %v311 = vsel %vm307, %v304, -inf
    %312 = vmax.xlane.f32.xlu0 %v311
    %v313 = vpop.xlane.xlu0 %312
    %v314 = vsub.f32 %v227, %v310
    %v315 = vsub.f32 %v304, %v313
    %v316 = vmul.f32 %v314, 1.442695
    %v317 = vpow.pop %v316
    %v318 = vmul.f32 %v315, 1.442695
    %v319 = vpow.pop %v318
    %v320 = vsel %vm307, %v317, 0.0
    %321 = vadd.xlane.f32.xlu0 %v320
    %v322 = vpop.xlane.xlu0 %321
    %v323 = vsel %vm307, %v319, 0.0
    %324 = vadd.xlane.f32.xlu0 %v323
    %v325 = vpop.xlane.xlu0 %324
    %v326 = vmul.f32 %v322, 8.0
    %v327 = vmul.f32 %v325, 8.0
    %v328 = vrcp.pop %v326
    %v329 = vmul.f32 %v317, %v328
    %v330 = vrcp.pop %v327
    %v331 = vmul.f32 %v319, %v330
    %v332 = vsel %vm307, %v329, 0.0
    %v333 = vrot.slane %v332, 4
    %v334 = vadd.f32 %v332, %v333
    %v335 = vrot.slane %v334, 2
    %v336 = vadd.f32 %v334, %v335
    %v337 = vrot.slane %v336, 1
    %v338 = vadd.f32 %v336, %v337
    %v339 = vsel %vm307, %v331, 0.0
    %v340 = vrot.slane %v339, 4
    %v341 = vadd.f32 %v339, %v340
    %v342 = vrot.slane %v341, 2
    %v343 = vadd.f32 %v341, %v342
    %v344 = vrot.slane %v343, 1
    %v345 = vadd.f32 %v343, %v344
    %346 = vrot.lane.b32.xlu0 %v144, 96
    %v347 = vpop.permute.xlu0 %346
    %v350 = vsel %vm307, %v338, 0
    %352 = vmatprep.subr.mxu0 0.0
    %353 = vmatpush1.msra.mxu0 %v347
    %354 = vmatprep.subr.mxu0 0.0
    %355 = vmatpush1.msra.mxu0 0.0
    %356 = vmatprep.subr.mxu0 0.0
    %357 = vmatpush1.msra.mxu0 0.0
    %358 = vmatprep.subr.mxu0 0.0
    %359 = vmatpush1.msra.mxu0 0.0
    %360 = vmatprep.subr.mxu0 0.0
    %361 = vmatpush1.msra.mxu0 0.0
    %362 = vmatprep.subr.mxu0 0.0
    %363 = vmatpush1.msra.mxu0 0.0
    %364 = vmatprep.subr.mxu0 0.0
    %365 = vmatpush1.msra.mxu0 0.0
    %366 = vmatprep.subr.mxu0 0.0
    %367 = vmatpush1.msra.mxu0 0.0
    %368 = vmatprep.subr.mxu0 0.0
    %369 = vmatpush1.msra.mxu0 0.0
    %370 = vmatprep.subr.mxu0 0.0
    %371 = vmatpush1.msra.mxu0 0.0
    %372 = vmatprep.subr.mxu0 0.0
    %373 = vmatpush1.msra.mxu0 0.0
    %374 = vmatprep.subr.mxu0 0.0
    %375 = vmatpush1.msra.mxu0 0.0
    %376 = vmatprep.subr.mxu0 0.0
    %377 = vmatpush1.msra.mxu0 0.0
    %378 = vmatprep.subr.mxu0 0.0
    %379 = vmatpush1.msra.mxu0 0.0
    %380 = vmatprep.subr.mxu0 0.0
    %381 = vmatpush1.msra.mxu0 0.0
    %382 = vmatprep.subr.mxu0 0.0
    %383 = vmatpush1.msra.mxu0 0.0
    %384 = vmatprep.subr.mxu0 0.0
    %385 = vmatpush1.msra.mxu0 0.0
    %386 = vmatprep.subr.mxu0 0.0
    %387 = vmatpush1.msra.mxu0 0.0
    %388 = vmatprep.subr.mxu0 0.0
    %389 = vmatpush1.msra.mxu0 0.0
    %390 = vmatprep.subr.mxu0 0.0
    %391 = vmatpush1.msra.mxu0 0.0
    %392 = vmatprep.subr.mxu0 0.0
    %393 = vmatpush1.msra.mxu0 0.0
    %394 = vmatprep.subr.mxu0 0.0
    %395 = vmatpush1.msra.mxu0 0.0
    %396 = vmatprep.subr.mxu0 0.0
    %397 = vmatpush1.msra.mxu0 0.0
    %398 = vmatprep.subr.mxu0 0.0
    %399 = vmatpush1.msra.mxu0 0.0
    %400 = vmatprep.subr.mxu0 0.0
    %401 = vmatpush1.msra.mxu0 0.0
    %402 = vmatprep.subr.mxu0 0.0
    %403 = vmatpush1.msra.mxu0 0.0
    %404 = vmatprep.subr.mxu0 0.0
    %405 = vmatpush1.msra.mxu0 0.0
    %406 = vmatprep.subr.mxu0 0.0
    %407 = vmatpush1.msra.mxu0 0.0
    %408 = vmatprep.subr.mxu0 0.0
    %409 = vmatpush1.msra.mxu0 0.0
    %410 = vmatprep.subr.mxu0 0.0
    %411 = vmatpush1.msra.mxu0 0.0
    %412 = vmatprep.subr.mxu0 0.0
    %413 = vmatpush1.msra.mxu0 0.0
    %414 = vmatprep.subr.mxu0 0.0
    %415 = vmatpush1.msra.mxu0 0.0
    %416 = vmatprep.mubr.f32.mxu0 0.0
    %417 = vmatmul.mubr.f32.gmra.mrb[0].mxu0 %v350
    %v418 = vpop.f32.mrb[0].mxu0
    %v419 = vadd.f32 0.0, %v418
    %v420 = vpop.f32.mrb[0].mxu0
    %421 = vdwg.mxu0
    %422 = vrot.lane.b32.xlu0 %v149, 96
    %v423 = vpop.permute.xlu0 %422
    %v426 = vsel %vm307, %v345, 0
    %428 = vmatprep.subr.mxu0 0.0
    %429 = vmatpush1.msra.mxu0 %v423
    %430 = vmatprep.subr.mxu0 0.0
    %431 = vmatpush1.msra.mxu0 0.0
    %432 = vmatprep.subr.mxu0 0.0
    %433 = vmatpush1.msra.mxu0 0.0
    %434 = vmatprep.subr.mxu0 0.0
    %435 = vmatpush1.msra.mxu0 0.0
    %436 = vmatprep.subr.mxu0 0.0
    %437 = vmatpush1.msra.mxu0 0.0
    %438 = vmatprep.subr.mxu0 0.0
    %439 = vmatpush1.msra.mxu0 0.0
    %440 = vmatprep.subr.mxu0 0.0
    %441 = vmatpush1.msra.mxu0 0.0
    %442 = vmatprep.subr.mxu0 0.0
    %443 = vmatpush1.msra.mxu0 0.0
    %444 = vmatprep.subr.mxu0 0.0
    %445 = vmatpush1.msra.mxu0 0.0
    %446 = vmatprep.subr.mxu0 0.0
    %447 = vmatpush1.msra.mxu0 0.0
    %448 = vmatprep.subr.mxu0 0.0
    %449 = vmatpush1.msra.mxu0 0.0
    %450 = vmatprep.subr.mxu0 0.0
    %451 = vmatpush1.msra.mxu0 0.0
    %452 = vmatprep.subr.mxu0 0.0
    %453 = vmatpush1.msra.mxu0 0.0
    %454 = vmatprep.subr.mxu0 0.0
    %455 = vmatpush1.msra.mxu0 0.0
    %456 = vmatprep.subr.mxu0 0.0
    %457 = vmatpush1.msra.mxu0 0.0
    %458 = vmatprep.subr.mxu0 0.0
    %459 = vmatpush1.msra.mxu0 0.0
    %460 = vmatprep.subr.mxu0 0.0
    %461 = vmatpush1.msra.mxu0 0.0
    %462 = vmatprep.subr.mxu0 0.0
    %463 = vmatpush1.msra.mxu0 0.0
    %464 = vmatprep.subr.mxu0 0.0
    %465 = vmatpush1.msra.mxu0 0.0
    %466 = vmatprep.subr.mxu0 0.0
    %467 = vmatpush1.msra.mxu0 0.0
    %468 = vmatprep.subr.mxu0 0.0
    %469 = vmatpush1.msra.mxu0 0.0
    %470 = vmatprep.subr.mxu0 0.0
    %471 = vmatpush1.msra.mxu0 0.0
    %472 = vmatprep.subr.mxu0 0.0
    %473 = vmatpush1.msra.mxu0 0.0
    %474 = vmatprep.subr.mxu0 0.0
    %475 = vmatpush1.msra.mxu0 0.0
    %476 = vmatprep.subr.mxu0 0.0
    %477 = vmatpush1.msra.mxu0 0.0
    %478 = vmatprep.subr.mxu0 0.0
    %479 = vmatpush1.msra.mxu0 0.0
    %480 = vmatprep.subr.mxu0 0.0
    %481 = vmatpush1.msra.mxu0 0.0
    %482 = vmatprep.subr.mxu0 0.0
    %483 = vmatpush1.msra.mxu0 0.0
    %484 = vmatprep.subr.mxu0 0.0
    %485 = vmatpush1.msra.mxu0 0.0
    %486 = vmatprep.subr.mxu0 0.0
    %487 = vmatpush1.msra.mxu0 0.0
    %488 = vmatprep.subr.mxu0 0.0
    %489 = vmatpush1.msra.mxu0 0.0
    %490 = vmatprep.subr.mxu0 0.0
    %491 = vmatpush1.msra.mxu0 0.0
    %492 = vmatprep.mubr.f32.mxu0 0.0
    %493 = vmatmul.mubr.f32.gmra.mrb[0].mxu0 %v426
    %v494 = vpop.f32.mrb[0].mxu0
    %v495 = vadd.f32 0.0, %v494
    %v496 = vpop.f32.mrb[0].mxu0
    %497 = vdwg.mxu0
    %v498 = vld [vmem:[#allocation7] sm:$0xff]
    %v499 = vld [vmem:[#allocation7 + $0x8] sm:$0xff]
    %v500 = vld [vmem:[%s3] sm:$0x1]
    %v502 = vlaneseq
    %v503 = vshrl.u32 %v502, 7
    %v504 = vsub.s32 0, %v503
    %v505 = vrot.slane %v500, %v504
    %v509 = vrot.slane %v495, 7
    %vm510 = vcmask 1041409
    %v511 = vsel %vm510, %v509, %v419
    %v512 = vsel %vm155, %v511, 0
    %514 = vmatprep.subr.mxu0 0.0
    %515 = vmatpush1.msra.mxu0 %v498
    %516 = vmatprep.subr.mxu0 0.0
    %517 = vmatpush1.msra.mxu0 %v499
    %518 = vmatprep.subr.mxu0 0.0
    %519 = vmatpush1.msra.mxu0 0.0
    %520 = vmatprep.subr.mxu0 0.0
    %521 = vmatpush1.msra.mxu0 0.0
    %522 = vmatprep.subr.mxu0 0.0
    %523 = vmatpush1.msra.mxu0 0.0
    %524 = vmatprep.subr.mxu0 0.0
    %525 = vmatpush1.msra.mxu0 0.0
    %526 = vmatprep.subr.mxu0 0.0
    %527 = vmatpush1.msra.mxu0 0.0
    %528 = vmatprep.subr.mxu0 0.0
    %529 = vmatpush1.msra.mxu0 0.0
    %530 = vmatprep.subr.mxu0 0.0
    %531 = vmatpush1.msra.mxu0 0.0
    %532 = vmatprep.subr.mxu0 0.0
    %533 = vmatpush1.msra.mxu0 0.0
    %534 = vmatprep.subr.mxu0 0.0
    %535 = vmatpush1.msra.mxu0 0.0
    %536 = vmatprep.subr.mxu0 0.0
    %537 = vmatpush1.msra.mxu0 0.0
    %538 = vmatprep.subr.mxu0 0.0
    %539 = vmatpush1.msra.mxu0 0.0
    %540 = vmatprep.subr.mxu0 0.0
    %541 = vmatpush1.msra.mxu0 0.0
    %542 = vmatprep.subr.mxu0 0.0
    %543 = vmatpush1.msra.mxu0 0.0
    %544 = vmatprep.subr.mxu0 0.0
    %545 = vmatpush1.msra.mxu0 0.0
    %546 = vmatprep.subr.mxu0 0.0
    %547 = vmatpush1.msra.mxu0 0.0
    %548 = vmatprep.subr.mxu0 0.0
    %549 = vmatpush1.msra.mxu0 0.0
    %550 = vmatprep.subr.mxu0 0.0
    %551 = vmatpush1.msra.mxu0 0.0
    %552 = vmatprep.subr.mxu0 0.0
    %553 = vmatpush1.msra.mxu0 0.0
    %554 = vmatprep.subr.mxu0 0.0
    %555 = vmatpush1.msra.mxu0 0.0
    %556 = vmatprep.subr.mxu0 0.0
    %557 = vmatpush1.msra.mxu0 0.0
    %558 = vmatprep.subr.mxu0 0.0
    %559 = vmatpush1.msra.mxu0 0.0
    %560 = vmatprep.subr.mxu0 0.0
    %561 = vmatpush1.msra.mxu0 0.0
    %562 = vmatprep.subr.mxu0 0.0
    %563 = vmatpush1.msra.mxu0 0.0
    %564 = vmatprep.subr.mxu0 0.0
    %565 = vmatpush1.msra.mxu0 0.0
    %566 = vmatprep.subr.mxu0 0.0
    %567 = vmatpush1.msra.mxu0 0.0
    %568 = vmatprep.subr.mxu0 0.0
    %569 = vmatpush1.msra.mxu0 0.0
    %570 = vmatprep.subr.mxu0 0.0
    %571 = vmatpush1.msra.mxu0 0.0
    %572 = vmatprep.subr.mxu0 0.0
    %573 = vmatpush1.msra.mxu0 0.0
    %574 = vmatprep.subr.mxu0 0.0
    %575 = vmatpush1.msra.mxu0 0.0
    %576 = vmatprep.subr.mxu0 0.0
    %577 = vmatpush1.msra.mxu0 0.0
    %578 = vmatprep.mubr.f32.mxu0 0.0
    %579 = vmatmul.mubr.f32.gmra.mrb[0].mxu0 %v512
    %v580 = vpop.f32.mrb[0].mxu0
    %v581 = vadd.f32 %v505, %v580
    %v582 = vpop.f32.mrb[0].mxu0
    %583 = vdwg.mxu0
    %vm584 = vcmask 254976
    %585 = vst.msk [vmem:[#allocation8] sm:$0x3] %vm584, %v581
    // Predicated region
    $region30: #{tpu_custom_call.1} parent=1 // pred_check
      _
    $region31: #{tpu_custom_call.1} parent=1 // pred_check_branch
      %587 = sbr.rel (0) target = $region33
    $region32: #{tpu_custom_call.1} parent=1 // pred_region
      %s589 = ssub.s32 32, 32
      %590 = vsyncadd [#allocation4], %s589
      %s592 = sshll.u32 [#allocation8], 4
      %s593 = int_to_ptr.vmem [resolvable:$true] %s592
      %595 = dma.vmem_to_hbm [thread:$0]  %s593, 32, %s4, [#allocation4]
    $region33: #{tpu_custom_call.1} parent=1 // pred_fallthru
      _
    // Predicated region
    $region34: #{tpu_custom_call.1} parent=1 // pred_check
      _
    $region35: #{tpu_custom_call.1} parent=1 // pred_check_branch
      %597 = sbr.rel (0) target = $region37
    $region36: #{tpu_custom_call.1} parent=1 // pred_region
      %598 = dma.done [#allocation4], 32
    $region37: #{tpu_custom_call.1} parent=1 // pred_fallthru
      _
    %599 = vsyncpa [#allocation3], 1
    %600 = vsyncpa [#allocation6], 1
    %601 = vsyncpa [#allocation4], 1

</llo_original>
